<compile_context>
chip_gen: v5e
topology: v5e:2x2
jax: 0.10.0
libtpu: 0.0.40
codegen_flags: <defaults>
</compile_context>

<pallas_src>
import functools

import jax
import jax.numpy as jnp
from jax import lax
from jax.experimental import pallas as pl
from jax.experimental.pallas import tpu as pltpu

_MIN_PALLAS_ELEMENTS = 64 * 1024   # below this, a fused XLA graph beats the kernel


def _vec_reward_norm_kernel(scalars_ref,   # SMEM (6,): count, bc/tot, count*bc/tot, 1/tot, zero0, zero1
                            rews_ref, mean_ref, var_ref, returns_ref,
                            out_ref, new_mean_ref, new_var_ref, new_returns_ref,
                            *, gamma: float, epsilon: float,
                            batch_count: float, inv_bc: float, inv_bm1: float):
    x = rews_ref[...]                               # (TM, E) f32, lane-dense
    mean = mean_ref[...]                            # (TM, 1)
    var = var_ref[...]                              # (TM, 1)

    count = scalars_ref[0]                          # running count (scalar)
    f_mean = scalars_ref[1]                         # bc / (count + bc)
    f_delta = scalars_ref[2]                        # count * bc / (count + bc)
    inv_tot = scalars_ref[3]                        # 1 / (count + bc)
    zero0 = scalars_ref[4]                          # 1.0 if any dones.long() == 0
    zero1 = scalars_ref[5]                          # 1.0 if any dones.long() == 1

    bc = jnp.float32(batch_count)

    # --- per-model batch moments: single-pass lane-axis reductions (XLU) ----
    s1 = jnp.sum(x, axis=1, keepdims=True)                               # (TM, 1)
    s2 = jnp.sum(x * x, axis=1, keepdims=True)                           # (TM, 1)
    batch_mean = s1 * jnp.float32(inv_bc)
    # torch.var default is unbiased: (sum(x^2) - E*mean^2) / (E-1)
    batch_var = (s2 - s1 * batch_mean) * jnp.float32(inv_bm1)

    # --- RunningMeanStd.update_from_moments (scalar factors precomputed) ----
    delta = batch_mean - mean                                            # (TM, 1)
    new_mean = mean + delta * f_mean
    m2 = var * count + batch_var * bc + (delta * delta) * f_delta
    new_var = m2 * inv_tot

    new_mean_ref[...] = new_mean
    new_var_ref[...] = new_var

    # --- normalize: x * rsqrt(new_var + eps); rsqrt hoisted to (TM,1)/EUP ---
    inv_std = lax.rsqrt(new_var + jnp.float32(epsilon))                  # (TM, 1)
    out_ref[...] = x * inv_std

    # --- discounted-return accumulator update -------------------------------
    new_ret = returns_ref[...] * jnp.float32(gamma) + x
    new_returns_ref[...] = new_ret

    # --- dones reset: PyTorch `returns[dones.long()] = 0` only ever zeroes
    #     flat indices 0 and 1 (binary dones) -> two SMEM flags, no mask stream
    @pl.when(pl.program_id(0) == 0)
    def _():
        tm, e = new_ret.shape
        row = lax.broadcasted_iota(jnp.int32, (tm, e), 0)
        col = lax.broadcasted_iota(jnp.int32, (tm, e), 1)
        flat = row * e + col                              # global flat env index
        kill = jnp.logical_or(
            jnp.logical_and(flat == 0, zero0 > jnp.float32(0.5)),
            jnp.logical_and(flat == 1, zero1 > jnp.float32(0.5)))
        new_returns_ref[...] = jnp.where(kill, jnp.float32(0.0), new_ret)


def _tpu_vmem_bytes(default: int = 128 << 20) -> int:
    """Best-effort trace-time VMEM capacity query (robust across jax versions)."""
    try:
        info = pltpu.get_tpu_info()
        for attr in ("vmem_capacity_bytes", "vmem_bytes", "vmem_size_bytes"):
            v = getattr(info, attr, None)
            if v:
                return int(v)
    except Exception:
        pass
    return default


def _block_budget_and_vmem_limit():
    """(per-block byte budget, vmem_limit_bytes) tuned per TPU generation."""
    vmem = _tpu_vmem_bytes()
    if vmem <= (64 << 20):                 # v7x-class: 64 MiB per TensorCore
        return (2 << 20), (48 << 20)
    return (4 << 20), (64 << 20)           # v5e / v6e: 128 MiB VMEM


def _pick_model_tile(padded_models: int, envs_per_model: int,
                     block_budget_bytes: int, min_steps: int) -> int:
    """Largest (8,·)-aligned model tile within the VMEM budget, >= min_steps grid."""
    budget_rows = max(8, block_budget_bytes // (4 * envs_per_model))
    tm = 8
    while (tm * 2 <= padded_models and padded_models % (tm * 2) == 0
           and tm * 2 <= budget_rows):
        tm *= 2
    # Keep >= min_steps grid steps (v7x megacore needs >= 2 steps to use both TCs).
    while padded_models // tm < min_steps and tm >= 16 and padded_models % (tm // 2) == 0:
        tm //= 2
    return tm


def _plain_jax_forward(rews, dones, mean, var, count, returns, *,
                       num_models, gamma, epsilon):
    """Pure-JAX mirror of the PyTorch module's forward (reference + tiny-problem path)."""
    num_envs, _ = returns.shape
    E = num_envs // num_models
    ret = returns * gamma + rews.reshape(returns.shape)
    r = rews.reshape(num_models, E)
    batch_mean = jnp.mean(r, axis=1)
    batch_var = jnp.var(r, axis=1, ddof=1)          # torch.var default: unbiased
    bc = float(E)
    delta = batch_mean - mean
    tot = count + bc
    new_mean = mean + delta * bc / tot
    m2 = var * count + batch_var * bc + jnp.square(delta) * count * bc / tot
    new_var = m2 / tot
    out = r / jnp.sqrt(new_var + epsilon)[:, None]
    ret = ret.at[dones.reshape(-1).astype(jnp.int32)].set(0.0)
    return out, new_mean, new_var, tot, ret


def vec_reward_normalizer_forward(rews, dones, mean, var, count, returns, *,
                                  num_models: int, gamma: float = 0.99,
                                  epsilon: float = 1e-8, use_pallas=None):
    """Functional VecRewardNormalizer.forward (state threaded explicitly).

    Args:
      rews:    (num_envs,) or (num_envs, 1) rewards
      dones:   (num_envs,) done flags (assumed binary, as in the PyTorch usage)
      mean:    (num_models,) running mean buffer
      var:     (num_models,) running var buffer
      count:   scalar running count (f32; loses precision past ~1.6e7 steps)
      returns: (num_envs, 1) discounted-return accumulator
      use_pallas: None = auto (XLA fallback for tiny problems), True/False = force
    Returns:
      (normalized rews (num_models, envs_per_model),
       new_mean (num_models,), new_var (num_models,), new_count scalar,
       new_returns (num_envs, 1))
    """
    num_envs, reward_dim = returns.shape
    assert reward_dim == 1, "module's double reshape only makes sense for reward_dim=1"
    envs_per_model = num_envs // num_models
    assert num_models * envs_per_model == num_envs
    assert envs_per_model >= 2, "torch.var(unbiased=True) needs >= 2 envs per model"

    if use_pallas is None:
        use_pallas = num_envs >= _MIN_PALLAS_ELEMENTS
    if not use_pallas:
        # Tiny problems: pallas_call launch + per-step overhead dominates.
        return _plain_jax_forward(rews, dones, mean, var, count, returns,
                                  num_models=num_models, gamma=gamma, epsilon=epsilon)

    # TODO(synk): when envs_per_model < 128 the lane axis is only partially used
    # (masked vst); a lane-dense repack (fold models into lanes + segmented
    # reduce) would help small-E configs, but typical RL shapes have E >= 128.

    rews2d = rews.reshape(num_models, envs_per_model).astype(jnp.float32)
    returns2d = returns.reshape(num_models, envs_per_model).astype(jnp.float32)
    mean2d = mean.reshape(num_models, 1).astype(jnp.float32)
    var2d = var.reshape(num_models, 1).astype(jnp.float32)

    # Pad the model axis up to a multiple of 8 so blocks stay (8,·)-aligned and
    # tiled/pipelined even for awkward num_models (outputs sliced back below).
    padded_models = ((num_models + 7) // 8) * 8
    pad = padded_models - num_models
    if pad:
        rews2d = jnp.pad(rews2d, ((0, pad), (0, 0)))
        returns2d = jnp.pad(returns2d, ((0, pad), (0, 0)))
        mean2d = jnp.pad(mean2d, ((0, pad), (0, 0)))
        var2d = jnp.pad(var2d, ((0, pad), (0, 0)), constant_values=1.0)

    # Scalar update factors + dones flags computed once (threaded via SMEM).
    # `returns[dones.long()] = 0` zeroes flat index 0 iff any done truncates to 0
    # and flat index 1 iff any done truncates to 1 (binary dones assumed).
    # TODO(synk): non-binary dones values (indexing arbitrary rows) would need a
    # scatter; not supported in the Pallas path.
    di = dones.reshape(-1).astype(jnp.int32)
    zero0 = jnp.any(di == 0).astype(jnp.float32)
    zero1 = jnp.any(di == 1).astype(jnp.float32)

    bc_f = jnp.float32(envs_per_model)
    count_f = jnp.asarray(count, jnp.float32).reshape(())
    tot_count = count_f + bc_f
    inv_tot = jnp.float32(1.0) / tot_count
    f_mean = bc_f * inv_tot
    f_delta = count_f * f_mean
    scalars = jnp.stack([count_f, f_mean, f_delta, inv_tot, zero0, zero1]).astype(jnp.float32)

    block_budget, vmem_limit = _block_budget_and_vmem_limit()
    min_steps = 2 if padded_models >= 16 else 1
    TM = _pick_model_tile(padded_models, envs_per_model, block_budget, min_steps)
    grid = (padded_models // TM,)
    inv_bc = 1.0 / float(envs_per_model)
    inv_bm1 = 1.0 / (envs_per_model - 1.0)

    kernel = functools.partial(
        _vec_reward_norm_kernel, gamma=float(gamma), epsilon=float(epsilon),
        batch_count=float(envs_per_model), inv_bc=float(inv_bc), inv_bm1=float(inv_bm1))

    wide = pl.BlockSpec((TM, envs_per_model), lambda i: (i, 0))
    stat = pl.BlockSpec((TM, 1), lambda i: (i, 0))
    smem = pl.BlockSpec(memory_space=pltpu.MemorySpace.SMEM)

    out_shapes = (
        jax.ShapeDtypeStruct((padded_models, envs_per_model), jnp.float32),  # normalized
        jax.ShapeDtypeStruct((padded_models, 1), jnp.float32),               # new mean
        jax.ShapeDtypeStruct((padded_models, 1), jnp.float32),               # new var
        jax.ShapeDtypeStruct((padded_models, envs_per_model), jnp.float32),  # new returns
    )

    out, new_mean, new_var, new_returns = pl.pallas_call(
        kernel,
        out_shape=out_shapes,
        grid=grid,
        in_specs=[smem, wide, stat, stat, wide],
        out_specs=(wide, stat, stat, wide),
        # rews / mean / var / returns are fresh reshaped intermediates -> donate
        # them so the 4 streams update in place (no extra HBM allocations).
        input_output_aliases={1: 0, 2: 1, 3: 2, 4: 3},
        compiler_params=pltpu.CompilerParams(
            dimension_semantics=("parallel",),
            vmem_limit_bytes=vmem_limit),
    )(scalars, rews2d, mean2d, var2d, returns2d)

    if pad:
        out = out[:num_models]
        new_mean = new_mean[:num_models]
        new_var = new_var[:num_models]
        new_returns = new_returns[:num_models]

    return (out,
            new_mean.reshape(num_models),
            new_var.reshape(num_models),
            tot_count,
            new_returns.reshape(num_envs, reward_dim))


if __name__ == "__main__":
    # VecRewardNormalizer(num_envs=2048, num_models=8, reward_dim=1):
    # envs_per_model = 256 keeps the env axis lane-dense (multiple of 128).
    num_models = 8
    envs_per_model = 256
    num_envs = num_models * envs_per_model
    reward_dim = 1
    gamma, epsilon = 0.99, 1e-8

    key = jax.random.PRNGKey(0)
    k_r, k_d, k_ret = jax.random.split(key, 3)
    rews = jax.random.normal(k_r, (num_envs,), dtype=jnp.float32) * 2.0 + 0.5
    dones = (jax.random.uniform(k_d, (num_envs,)) < 0.3).astype(jnp.float32)
    returns0 = jax.random.normal(k_ret, (num_envs, reward_dim), dtype=jnp.float32)

    mean0 = jnp.zeros((num_models,), jnp.float32)   # default buffer init
    var0 = jnp.ones((num_models,), jnp.float32)
    count0 = jnp.float32(epsilon)                   # self.count = epsilon

    # Pallas path (forced so the kernel is exercised at this small demo size).
    outs = vec_reward_normalizer_forward(
        rews, dones, mean0, var0, count0, returns0,
        num_models=num_models, gamma=gamma, epsilon=epsilon, use_pallas=True)
    jax.block_until_ready(outs)
    out, new_mean, new_var, new_count, new_returns = outs

    r_out, r_mean, r_var, r_count, r_ret = _plain_jax_forward(
        rews, dones, mean0, var0, count0, returns0,
        num_models=num_models, gamma=gamma, epsilon=epsilon)

    assert jnp.allclose(out, r_out, atol=1e-4, rtol=1e-4)
    assert jnp.allclose(new_mean, r_mean, atol=1e-4, rtol=1e-4)
    assert jnp.allclose(new_var, r_var, atol=1e-4, rtol=1e-4)
    assert jnp.allclose(new_count, r_count, atol=1e-5, rtol=1e-5)
    assert jnp.allclose(new_returns, r_ret.reshape(num_envs, reward_dim),
                        atol=1e-4, rtol=1e-4)

    # Auto path (tiny problem -> plain-XLA fallback) must agree too.
    outs_auto = vec_reward_normalizer_forward(
        rews, dones, mean0, var0, count0, returns0,
        num_models=num_models, gamma=gamma, epsilon=epsilon)
    jax.block_until_ready(outs_auto)
    assert jnp.allclose(outs_auto[0], r_out, atol=1e-4, rtol=1e-4)

    print("KERNEL_OK")
</pallas_src>

<mosaic_0001>
module attributes {stable_mosaic.version = 11 : i64} {
  func.func @_vec_reward_norm_kernel(%arg0: i32, %arg1: memref<6xf32, #tpu.memory_space<smem>>, %arg2: memref<8x256xf32, #tpu.memory_space<vmem>>, %arg3: memref<8x1xf32, #tpu.memory_space<vmem>>, %arg4: memref<8x1xf32, #tpu.memory_space<vmem>>, %arg5: memref<8x256xf32, #tpu.memory_space<vmem>>, %arg6: memref<8x256xf32, #tpu.memory_space<vmem>>, %arg7: memref<8x1xf32, #tpu.memory_space<vmem>>, %arg8: memref<8x1xf32, #tpu.memory_space<vmem>>, %arg9: memref<8x256xf32, #tpu.memory_space<vmem>>) attributes {dimension_semantics = [#tpu.dimension_semantics<parallel>], iteration_bounds = array<i64: 1>, scalar_prefetch = 0 : i64, scratch_operands = 0 : i64, tpu.core_type = #tpu.core_type<tc>, window_params = [{transform_indices = @transform_0, window_bounds = array<i64: 6>}, {transform_indices = @transform_1, window_bounds = array<i64: 8, 256>}, {transform_indices = @transform_2, window_bounds = array<i64: 8, 1>}, {transform_indices = @transform_3, window_bounds = array<i64: 8, 1>}, {transform_indices = @transform_4, window_bounds = array<i64: 8, 256>}, {transform_indices = @transform_5, window_bounds = array<i64: 8, 256>}, {transform_indices = @transform_6, window_bounds = array<i64: 8, 1>}, {transform_indices = @transform_7, window_bounds = array<i64: 8, 1>}, {transform_indices = @transform_8, window_bounds = array<i64: 8, 256>}]} {
    %c0 = arith.constant 0 : index
    %c0_0 = arith.constant 0 : index
    %0 = vector.load %arg2[%c0, %c0_0] : memref<8x256xf32, #tpu.memory_space<vmem>>, vector<8x256xf32>
    %c0_1 = arith.constant 0 : index
    %c0_2 = arith.constant 0 : index
    %1 = vector.load %arg3[%c0_1, %c0_2] : memref<8x1xf32, #tpu.memory_space<vmem>>, vector<8x1xf32>
    %c0_3 = arith.constant 0 : index
    %c0_4 = arith.constant 0 : index
    %2 = vector.load %arg4[%c0_3, %c0_4] : memref<8x1xf32, #tpu.memory_space<vmem>>, vector<8x1xf32>
    %c0_5 = arith.constant 0 : index
    %3 = memref.load %arg1[%c0_5] : memref<6xf32, #tpu.memory_space<smem>>
    %c1 = arith.constant 1 : index
    %4 = memref.load %arg1[%c1] : memref<6xf32, #tpu.memory_space<smem>>
    %c2 = arith.constant 2 : index
    %5 = memref.load %arg1[%c2] : memref<6xf32, #tpu.memory_space<smem>>
    %c3 = arith.constant 3 : index
    %6 = memref.load %arg1[%c3] : memref<6xf32, #tpu.memory_space<smem>>
    %c4 = arith.constant 4 : index
    %7 = memref.load %arg1[%c4] : memref<6xf32, #tpu.memory_space<smem>>
    %c5 = arith.constant 5 : index
    %8 = memref.load %arg1[%c5] : memref<6xf32, #tpu.memory_space<smem>>
    %cst = arith.constant dense<0.000000e+00> : vector<8xf32>
    %9 = vector.multi_reduction <add>, %0, %cst [1] : vector<8x256xf32> to vector<8xf32>
    %10 = vector.shape_cast %9 : vector<8xf32> to vector<8x1xf32>
    %11 = arith.mulf %0, %0 : vector<8x256xf32>
    %cst_6 = arith.constant dense<0.000000e+00> : vector<8xf32>
    %12 = vector.multi_reduction <add>, %11, %cst_6 [1] : vector<8x256xf32> to vector<8xf32>
    %13 = vector.shape_cast %12 : vector<8xf32> to vector<8x1xf32>
    %cst_7 = arith.constant 3.906250e-03 : f32
    %14 = vector.broadcast %cst_7 : f32 to vector<8x1xf32>
    %15 = arith.mulf %10, %14 : vector<8x1xf32>
    %16 = arith.mulf %10, %15 : vector<8x1xf32>
    %17 = arith.subf %13, %16 : vector<8x1xf32>
    %cst_8 = arith.constant 0.00392156886 : f32
    %18 = vector.broadcast %cst_8 : f32 to vector<8x1xf32>
    %19 = arith.mulf %17, %18 : vector<8x1xf32>
    %20 = arith.subf %15, %1 : vector<8x1xf32>
    %21 = vector.broadcast %4 : f32 to vector<8x1xf32>
    %22 = arith.mulf %20, %21 : vector<8x1xf32>
    %23 = arith.addf %1, %22 : vector<8x1xf32>
    %24 = vector.broadcast %3 : f32 to vector<8x1xf32>
    %25 = arith.mulf %2, %24 : vector<8x1xf32>
    %cst_9 = arith.constant 2.560000e+02 : f32
    %26 = vector.broadcast %cst_9 : f32 to vector<8x1xf32>
    %27 = arith.mulf %19, %26 : vector<8x1xf32>
    %28 = arith.addf %25, %27 : vector<8x1xf32>
    %29 = arith.mulf %20, %20 : vector<8x1xf32>
    %30 = vector.broadcast %5 : f32 to vector<8x1xf32>
    %31 = arith.mulf %29, %30 : vector<8x1xf32>
    %32 = arith.addf %28, %31 : vector<8x1xf32>
    %33 = vector.broadcast %6 : f32 to vector<8x1xf32>
    %34 = arith.mulf %32, %33 : vector<8x1xf32>
    %c0_10 = arith.constant 0 : index
    %c0_11 = arith.constant 0 : index
    %35 = vector.load %arg7[%c0_10, %c0_11] : memref<8x1xf32, #tpu.memory_space<vmem>>, vector<8x1xf32>
    tpu.vector_store %arg7[%c0_10, %c0_11], %23 {strides = array<i32>} : memref<8x1xf32, #tpu.memory_space<vmem>>, vector<8x1xf32>,
    %c0_12 = arith.constant 0 : index
    %c0_13 = arith.constant 0 : index
    %36 = vector.load %arg8[%c0_12, %c0_13] : memref<8x1xf32, #tpu.memory_space<vmem>>, vector<8x1xf32>
    tpu.vector_store %arg8[%c0_12, %c0_13], %34 {strides = array<i32>} : memref<8x1xf32, #tpu.memory_space<vmem>>, vector<8x1xf32>,
    %cst_14 = arith.constant 9.99999993E-9 : f32
    %37 = vector.broadcast %cst_14 : f32 to vector<8x1xf32>
    %38 = arith.addf %34, %37 : vector<8x1xf32>
    %39 = math.rsqrt %38 : vector<8x1xf32>
    %40 = vector.broadcast %39 : vector<8x1xf32> to vector<8x256xf32>
    %41 = arith.mulf %0, %40 : vector<8x256xf32>
    %c0_15 = arith.constant 0 : index
    %c0_16 = arith.constant 0 : index
    %42 = vector.load %arg6[%c0_15, %c0_16] : memref<8x256xf32, #tpu.memory_space<vmem>>, vector<8x256xf32>
    tpu.vector_store %arg6[%c0_15, %c0_16], %41 {strides = array<i32>} : memref<8x256xf32, #tpu.memory_space<vmem>>, vector<8x256xf32>,
    %c0_17 = arith.constant 0 : index
    %c0_18 = arith.constant 0 : index
    %43 = vector.load %arg5[%c0_17, %c0_18] : memref<8x256xf32, #tpu.memory_space<vmem>>, vector<8x256xf32>
    %cst_19 = arith.constant 9.900000e-01 : f32
    %44 = vector.broadcast %cst_19 : f32 to vector<8x256xf32>
    %45 = arith.mulf %43, %44 : vector<8x256xf32>
    %46 = arith.addf %45, %0 : vector<8x256xf32>
    %c0_20 = arith.constant 0 : index
    %c0_21 = arith.constant 0 : index
    %47 = vector.load %arg9[%c0_20, %c0_21] : memref<8x256xf32, #tpu.memory_space<vmem>>, vector<8x256xf32>
    tpu.vector_store %arg9[%c0_20, %c0_21], %46 {strides = array<i32>} : memref<8x256xf32, #tpu.memory_space<vmem>>, vector<8x256xf32>,
    %c0_i32 = arith.constant 0 : i32
    %48 = arith.cmpi eq, %arg0, %c0_i32 : i32
    %49 = arith.extui %48 : i1 to i32
    %c0_i32_22 = arith.constant 0 : i32
    %50 = arith.cmpi ne, %49, %c0_i32_22 : i32
    scf.if %50 {
      %51 = tpu.iota {dimensions = array<i32: 0>} : vector<8x256xi32>
      %52 = tpu.iota {dimensions = array<i32: 1>} : vector<8x256xi32>
      %c256_i32 = arith.constant 256 : i32
      %53 = vector.broadcast %c256_i32 : i32 to vector<8x256xi32>
      %54 = arith.muli %51, %53 : vector<8x256xi32>
      %55 = arith.addi %54, %52 : vector<8x256xi32>
      %c0_i32_23 = arith.constant 0 : i32
      %56 = vector.broadcast %c0_i32_23 : i32 to vector<8x256xi32>
      %57 = arith.cmpi eq, %55, %56 : vector<8x256xi32>
      %cst_24 = arith.constant 5.000000e-01 : f32
      %58 = arith.cmpf ogt, %7, %cst_24 : f32
      %59 = vector.broadcast %58 : i1 to vector<8x256xi1>
      %60 = arith.andi %57, %59 : vector<8x256xi1>
      %c1_i32 = arith.constant 1 : i32
      %61 = vector.broadcast %c1_i32 : i32 to vector<8x256xi32>
      %62 = arith.cmpi eq, %55, %61 : vector<8x256xi32>
      %cst_25 = arith.constant 5.000000e-01 : f32
      %63 = arith.cmpf ogt, %8, %cst_25 : f32
      %64 = vector.broadcast %63 : i1 to vector<8x256xi1>
      %65 = arith.andi %62, %64 : vector<8x256xi1>
      %66 = arith.ori %60, %65 : vector<8x256xi1>
      %cst_26 = arith.constant 0.000000e+00 : f32
      %67 = vector.broadcast %cst_26 : f32 to vector<8x256xf32>
      %68 = arith.select %66, %67, %46 : vector<8x256xi1>, vector<8x256xf32>
      %c0_27 = arith.constant 0 : index
      %c0_28 = arith.constant 0 : index
      %69 = vector.load %arg9[%c0_27, %c0_28] : memref<8x256xf32, #tpu.memory_space<vmem>>, vector<8x256xf32>
      tpu.vector_store %arg9[%c0_27, %c0_28], %68 {strides = array<i32>} : memref<8x256xf32, #tpu.memory_space<vmem>>, vector<8x256xf32>,
    } else {
    }
    return
  }
  func.func @transform_0(%arg0: i32) -> i32 {
    %c0_i32 = arith.constant 0 : i32
    %c0_i32_0 = arith.constant 0 : i32
    return %c0_i32 : i32
  }
  func.func @transform_1(%arg0: i32) -> (i32, i32) {
    %c0_i32 = arith.constant 0 : i32
    %c0_i32_0 = arith.constant 0 : i32
    return %arg0, %c0_i32 : i32, i32
  }
  func.func @transform_2(%arg0: i32) -> (i32, i32) {
    %c0_i32 = arith.constant 0 : i32
    %c0_i32_0 = arith.constant 0 : i32
    return %arg0, %c0_i32 : i32, i32
  }
  func.func @transform_3(%arg0: i32) -> (i32, i32) {
    %c0_i32 = arith.constant 0 : i32
    %c0_i32_0 = arith.constant 0 : i32
    return %arg0, %c0_i32 : i32, i32
  }
  func.func @transform_4(%arg0: i32) -> (i32, i32) {
    %c0_i32 = arith.constant 0 : i32
    %c0_i32_0 = arith.constant 0 : i32
    return %arg0, %c0_i32 : i32, i32
  }
  func.func @transform_5(%arg0: i32) -> (i32, i32) {
    %c0_i32 = arith.constant 0 : i32
    %c0_i32_0 = arith.constant 0 : i32
    return %arg0, %c0_i32 : i32, i32
  }
  func.func @transform_6(%arg0: i32) -> (i32, i32) {
    %c0_i32 = arith.constant 0 : i32
    %c0_i32_0 = arith.constant 0 : i32
    return %arg0, %c0_i32 : i32, i32
  }
  func.func @transform_7(%arg0: i32) -> (i32, i32) {
    %c0_i32 = arith.constant 0 : i32
    %c0_i32_0 = arith.constant 0 : i32
    return %arg0, %c0_i32 : i32, i32
  }
  func.func @transform_8(%arg0: i32) -> (i32, i32) {
    %c0_i32 = arith.constant 0 : i32
    %c0_i32_0 = arith.constant 0 : i32
    return %arg0, %c0_i32 : i32, i32
  }
}

</mosaic_0001>

<llo_original>
// kernel: tpu_custom_call.1
$region0: #{tpu_custom_call.1}
  #allocation0 [shape = 'u32[]', space=smem, size = 0x4, offset = 0x4, fixed_abs, tag = 'smem constant byte address 0x4 - core index']
  #allocation1 [shape = 'u32[72,128]{1,0:T(1,128)}', space=vmem, size = 0x9000, scoped, tag = 'internal scratch']
  %s0 = inlined_call_operand.vmem [shape: f32[6], index: 0, kind: input, shape index: {}]
  %s1 = inlined_call_operand.vmem [shape: f32[8,256], index: 1, kind: input, shape index: {}, may-alias: {1,5}]
  %s2 = inlined_call_operand.vmem [shape: f32[8,1], index: 2, kind: input, shape index: {}, may-alias: {2,6}]
  %s3 = inlined_call_operand.vmem [shape: f32[8,1], index: 3, kind: input, shape index: {}, may-alias: {3,7}]
  %s4 = inlined_call_operand.vmem [shape: f32[8,256], index: 4, kind: input, shape index: {}, may-alias: {4,8}]
  %s5 = inlined_call_operand.vmem [shape: f32[8,256], index: 5, kind: output, shape index: {0}, may-alias: {1,5}]
  %s6 = inlined_call_operand.vmem [shape: f32[8,1], index: 6, kind: output, shape index: {1}, may-alias: {2,6}]
  %s7 = inlined_call_operand.vmem [shape: f32[8,1], index: 7, kind: output, shape index: {2}, may-alias: {3,7}]
  %s8 = inlined_call_operand.vmem [shape: f32[8,256], index: 8, kind: output, shape index: {3}, may-alias: {4,8}]
  %9 = xla_tuple %s5, %s6, %s7, %s8
  %s10 = sld [smem:[#allocation0]]
  $region62: #{tpu_custom_call.1} parent=0
    _
  %s12 = ssub.s32 1, %s10
  %s13 = scalar_select 0, %s12, %s10
  $region1: #{tpu_custom_call.1} parent=0
    #allocation2 [shape = 'u8[512]{0}', space=smem, size = 0x200, scoped, tag = 'input window, operand 0, single buffered']
    #allocation3 [shape = 's32[1]{0}', space=sflag, size = 0x4, scoped, tag = 'scoped memory for tpu_custom_call.1']
    %14 = vsyncpa [#allocation3], 0
    // Predicated region
    $region2: #{tpu_custom_call.1} parent=1 // pred_check
      _
    $region3: #{tpu_custom_call.1} parent=1 // pred_check_branch
      %16 = sbr.rel (0) target = $region5
    $region4: #{tpu_custom_call.1} parent=1 // pred_region
      %18 = vsyncadd [#allocation3], 0
      %s20 = sshll.u32 %s0, 4
      %s21 = int_to_ptr.vmem [resolvable:$true] %s20
      %23 = dma.vmem_to_smem %s21, 16, [#allocation2], [#allocation3]
    $region5: #{tpu_custom_call.1} parent=1 // pred_fallthru
      _
    // Predicated region
    $region6: #{tpu_custom_call.1} parent=1 // pred_check
      _
    $region7: #{tpu_custom_call.1} parent=1 // pred_check_branch
      %25 = sbr.rel (0) target = $region9
    $region8: #{tpu_custom_call.1} parent=1 // pred_region
      _
    $region9: #{tpu_custom_call.1} parent=1 // pred_fallthru
      _
    // Predicated region
    $region10: #{tpu_custom_call.1} parent=1 // pred_check
      _
    $region11: #{tpu_custom_call.1} parent=1 // pred_check_branch
      %27 = sbr.rel (0) target = $region13
    $region12: #{tpu_custom_call.1} parent=1 // pred_region
      _
    $region13: #{tpu_custom_call.1} parent=1 // pred_fallthru
      _
    // Predicated region
    $region14: #{tpu_custom_call.1} parent=1 // pred_check
      _
    $region15: #{tpu_custom_call.1} parent=1 // pred_check_branch
      %29 = sbr.rel (0) target = $region17
    $region16: #{tpu_custom_call.1} parent=1 // pred_region
      _
    $region17: #{tpu_custom_call.1} parent=1 // pred_fallthru
      _
    // Predicated region
    $region18: #{tpu_custom_call.1} parent=1 // pred_check
      _
    $region19: #{tpu_custom_call.1} parent=1 // pred_check_branch
      %31 = sbr.rel (0) target = $region21
    $region20: #{tpu_custom_call.1} parent=1 // pred_region
      _
    $region21: #{tpu_custom_call.1} parent=1 // pred_fallthru
      _
    // Predicated region
    $region22: #{tpu_custom_call.1} parent=1 // pred_check
      _
    $region23: #{tpu_custom_call.1} parent=1 // pred_check_branch
      %33 = sbr.rel (0) target = $region25
    $region24: #{tpu_custom_call.1} parent=1 // pred_region
      %35 = dma.done [#allocation3], 16
    $region25: #{tpu_custom_call.1} parent=1 // pred_fallthru
      _
    %36 = sfence
    %v37 = vld [vmem:[%s1] sm:$0xff]
    %v38 = vld [vmem:[%s1 + $0x8] sm:$0xff]
    %v39 = vld [vmem:[%s2] sm:$0xff]
    %v40 = vld [vmem:[%s3] sm:$0xff]
    %s41 = sld [smem:[#allocation2]]
    %s42 = sld [smem:[#allocation2 + $0x1]]
    %s43 = sld [smem:[#allocation2 + $0x2]]
    %s44 = sld [smem:[#allocation2 + $0x3]]
    %s45 = sld [smem:[#allocation2 + $0x4]]
    %s46 = sld [smem:[#allocation2 + $0x5]]
    %v47 = vadd.f32 %v37, %v38
    %48 = vadd.xlane.f32.xlu0 %v47
    %v49 = vpop.xlane.xlu0 %48
    %v50 = vmul.f32 %v37, %v37
    %v51 = vmul.f32 %v38, %v38
    %v52 = vadd.f32 %v50, %v51
    %53 = vadd.xlane.f32.xlu0 %v52
    %v54 = vpop.xlane.xlu0 %53
    %v55 = vmul.f32 %v49, 0.00390625
    %v56 = vmul.f32 %v49, %v55
    %v57 = vsub.f32 %v54, %v56
    %v58 = vmul.f32 %v57, 0.003921569
    %v59 = vsub.f32 %v55, %v39
    %v60 = vstv %s42
    %v61 = vmul.f32 %v59, %v60
    %v62 = vadd.f32 %v39, %v61
    %v63 = vstv %s41
    %v64 = vmul.f32 %v40, %v63
    %v65 = vmul.f32 %v58, 256.0
    %v66 = vadd.f32 %v64, %v65
    %v67 = vmul.f32 %v59, %v59
    %v68 = vstv %s43
    %v69 = vmul.f32 %v67, %v68
    %v70 = vadd.f32 %v66, %v69
    %v71 = vstv %s44
    %v72 = vmul.f32 %v70, %v71
    %vm73 = vcmask 7168
    %74 = vst.msk [vmem:[%s6] sm:$0xff] %vm73, %v62
    %75 = vst.msk [vmem:[%s7] sm:$0xff] %vm73, %v72
    %v76 = vadd.f32 %v72, 1e-08
    %v77 = vrsqrt.pop %v76
    %v78 = vmul.f32 %v77, %v76
    %v79 = vmul.f32 %v78, %v77
    %v80 = vmul.f32 0.5, %v79
    %v81 = vsub.f32 1.5, %v80
    %v82 = vmul.f32 %v77, %v81
    %vm83 = vweird.f32 %v76
    %vm84 = vweird.f32 %v77
    %vm85 = vmor %vm83, %vm84
    %v86 = vsel %vm85, %v77, %v82
    %88 = vset.pattern.permute.xlu0 0
    %89 = vperm.xlu0 %88, %v86
    %v90 = vpop.permute.xlu0 %89
    %v92 = vmul.f32 %v37, %v90
    %v93 = vmul.f32 %v38, %v90
    %94 = vst [vmem:[%s5] sm:$0xff] %v92
    %95 = vst [vmem:[%s5 + $0x8] sm:$0xff] %v93
    %v96 = vld [vmem:[%s4] sm:$0xff]
    %v97 = vld [vmem:[%s4 + $0x8] sm:$0xff]
    %v98 = vmul.f32 %v96, 0.99
    %v99 = vmul.f32 %v97, 0.99
    %v100 = vadd.f32 %v98, %v37
    %v101 = vadd.f32 %v99, %v38
    %102 = vst [vmem:[%s8] sm:$0xff] %v100
    %103 = vst [vmem:[%s8 + $0x8] sm:$0xff] %v101
    %p104 = scmp.eq.s32.totalorder 0, 0
    // Predicated region
    $region26: #{tpu_custom_call.1} parent=1 // pred_check
      %p105 = pneg %p104
    $region27: #{tpu_custom_call.1} parent=1 // pred_check_branch
      %107 = sbr.rel (%p105) target = $region29
    $region28: #{tpu_custom_call.1} parent=1 // pred_region
      %v108 = vlaneseq
      %v109 = vshrl.u32 %v108, 7
      %v110 = vlaneseq
      %v111 = vand.u32 %v110, 127
      %v112 = vadd.s32 %v111, 128
      %v113 = vmul.u32 %v109, 256
      %v114 = vadd.s32 %v113, %v111
      %v115 = vadd.s32 %v113, %v112
      %vm116 = vcmp.eq.s32.totalorder %v114, 0
      %vm117 = vcmp.eq.s32.totalorder %v115, 0
      %p118 = scmp.gt.f32.partialorder %s45, 0.5
      %s119 = scalar_select %p118, 1, 0
      %v120 = vstv %s119
      %vm121 = vcmp.eq.s32.totalorder %v120, 1
      %vm122 = vmand %vm116, %vm121
      %vm123 = vmand %vm117, %vm121
      %vm124 = vcmp.eq.s32.totalorder %v114, 1
      %vm125 = vcmp.eq.s32.totalorder %v115, 1
      %p126 = scmp.gt.f32.partialorder %s46, 0.5
      %s127 = scalar_select %p126, 1, 0
      %v128 = vstv %s127
      %vm129 = vcmp.eq.s32.totalorder %v128, 1
      %vm130 = vmand %vm124, %vm129
      %vm131 = vmand %vm125, %vm129
      %vm132 = vmor %vm122, %vm130
      %vm133 = vmor %vm123, %vm131
      %v134 = vsel %vm132, 0.0, %v100
      %v135 = vsel %vm133, 0.0, %v101
      %136 = vst [vmem:[%s8] sm:$0xff] %v134
      %137 = vst [vmem:[%s8 + $0x8] sm:$0xff] %v135
    $region29: #{tpu_custom_call.1} parent=1 // pred_fallthru
      _
    // Predicated region
    $region30: #{tpu_custom_call.1} parent=1 // pred_check
      _
    $region31: #{tpu_custom_call.1} parent=1 // pred_check_branch
      %139 = sbr.rel (0) target = $region33
    $region32: #{tpu_custom_call.1} parent=1 // pred_region
      _
    $region33: #{tpu_custom_call.1} parent=1 // pred_fallthru
      _
    // Predicated region
    $region34: #{tpu_custom_call.1} parent=1 // pred_check
      _
    $region35: #{tpu_custom_call.1} parent=1 // pred_check_branch
      %141 = sbr.rel (0) target = $region37
    $region36: #{tpu_custom_call.1} parent=1 // pred_region
      _
    $region37: #{tpu_custom_call.1} parent=1 // pred_fallthru
      _
    // Predicated region
    $region38: #{tpu_custom_call.1} parent=1 // pred_check
      _
    $region39: #{tpu_custom_call.1} parent=1 // pred_check_branch
      %143 = sbr.rel (0) target = $region41
    $region40: #{tpu_custom_call.1} parent=1 // pred_region
      _
    $region41: #{tpu_custom_call.1} parent=1 // pred_fallthru
      _
    // Predicated region
    $region42: #{tpu_custom_call.1} parent=1 // pred_check
      _
    $region43: #{tpu_custom_call.1} parent=1 // pred_check_branch
      %145 = sbr.rel (0) target = $region45
    $region44: #{tpu_custom_call.1} parent=1 // pred_region
      _
    $region45: #{tpu_custom_call.1} parent=1 // pred_fallthru
      _
    // Predicated region
    $region46: #{tpu_custom_call.1} parent=1 // pred_check
      _
    $region47: #{tpu_custom_call.1} parent=1 // pred_check_branch
      %147 = sbr.rel (0) target = $region49
    $region48: #{tpu_custom_call.1} parent=1 // pred_region
      _
    $region49: #{tpu_custom_call.1} parent=1 // pred_fallthru
      _
    // Predicated region
    $region50: #{tpu_custom_call.1} parent=1 // pred_check
      _
    $region51: #{tpu_custom_call.1} parent=1 // pred_check_branch
      %149 = sbr.rel (0) target = $region53
    $region52: #{tpu_custom_call.1} parent=1 // pred_region
      _
    $region53: #{tpu_custom_call.1} parent=1 // pred_fallthru
      _
    // Predicated region
    $region54: #{tpu_custom_call.1} parent=1 // pred_check
      _
    $region55: #{tpu_custom_call.1} parent=1 // pred_check_branch
      %151 = sbr.rel (0) target = $region57
    $region56: #{tpu_custom_call.1} parent=1 // pred_region
      _
    $region57: #{tpu_custom_call.1} parent=1 // pred_fallthru
      _
    // Predicated region
    $region58: #{tpu_custom_call.1} parent=1 // pred_check
      _
    $region59: #{tpu_custom_call.1} parent=1 // pred_check_branch
      %153 = sbr.rel (0) target = $region61
    $region60: #{tpu_custom_call.1} parent=1 // pred_region
      _
    $region61: #{tpu_custom_call.1} parent=1 // pred_fallthru
      _
    %154 = vsyncpa [#allocation3], 1

</llo_original>
